<compile_context>
chip_gen: v7x
topology: tpu7x:2x2x1
jax: 0.10.0
libtpu: 0.0.40
codegen_flags: <defaults>
</compile_context>

<pallas_src>
import functools

import jax
import jax.numpy as jnp
import numpy as np
from jax.experimental import pallas as pl
from jax.experimental.pallas import tpu as pltpu

HIDDEN = 32          # args.image_feat_size (small synthetic size)
EPS = 1e-12          # LayerNorm eps used by the module

_VMEM = functools.partial(pl.BlockSpec, memory_space=pltpu.MemorySpace.VMEM)
_SMEM = functools.partial(pl.BlockSpec, memory_space=pltpu.MemorySpace.SMEM)


# ----------------------------------------------------------------------------------
# in-kernel helpers (operate on loaded values)
# ----------------------------------------------------------------------------------
def _position_encode(x, w, b, gamma, beta):
    """Linear(3,H) + LayerNorm, computed as 3 VPU broadcast-FMAs (no MXU).

    x: (B, N, 3) f32 value, w: (3, H), b/gamma/beta: (1, H).
    """
    h = (x[..., 0:1] * w[0:1, :]
         + x[..., 1:2] * w[1:2, :]
         + x[..., 2:3] * w[2:3, :]
         + b)                                               # (B, N, H)
    mu = jnp.mean(h, axis=-1, keepdims=True)
    var = jnp.mean((h - mu) ** 2, axis=-1, keepdims=True)   # biased var (PyTorch LN)
    return (h - mu) * jax.lax.rsqrt(var + EPS) * gamma + beta


# ----------------------------------------------------------------------------------
# Kernel 1: mode == 'global_pos'   (single launch, whole batch, no grid)
#   out = LayerNorm(global_pos @ W + b) * txt_embeds[:, :1, :]
# ----------------------------------------------------------------------------------
def _global_pos_kernel(pos_ref, txt_ref, w_ref, b_ref, g_ref, be_ref, out_ref):
    x = pos_ref[...].astype(jnp.float32)                          # (B, N, 3)
    pe = _position_encode(x, w_ref[...], b_ref[...], g_ref[...], be_ref[...])
    txt_first = txt_ref[...].astype(jnp.float32)[:, 0:1, :]       # (B, 1, H)
    out_ref[...] = (pe * txt_first).astype(out_ref.dtype)


def global_pos_forward(global_pos, txt_embeds, params):
    """global_pos: (B, N, 3), txt_embeds: (B, L, H) -> (B, N, H)."""
    B, N, _ = global_pos.shape
    H = txt_embeds.shape[-1]
    p = params["position_encoder"]
    return pl.pallas_call(
        _global_pos_kernel,
        out_shape=jax.ShapeDtypeStruct((B, N, H), jnp.float32),
        in_specs=[_VMEM()] * 6,
        out_specs=_VMEM(),
    )(global_pos, txt_embeds, p["w"], p["b"], p["gamma"], p["beta"])


# ----------------------------------------------------------------------------------
# Kernel 2: mode == 'history' tail    hist_embeds + position_encoder(position)
# (fused: no ones tensor, no extra elementwise pass)
# ----------------------------------------------------------------------------------
def _history_kernel(pos_ref, hist_ref, w_ref, b_ref, g_ref, be_ref, out_ref):
    x = pos_ref[...].astype(jnp.float32)                          # (B, T, 3)
    pe = _position_encode(x, w_ref[...], b_ref[...], g_ref[...], be_ref[...])
    out_ref[...] = (hist_ref[...].astype(jnp.float32) + pe).astype(out_ref.dtype)


def history_forward(hist_embeds, position, params):
    """hist_embeds: (B, T, H), position: (B, T, 3) -> (B, T, H)."""
    B, T, H = hist_embeds.shape
    p = params["position_encoder"]
    return pl.pallas_call(
        _history_kernel,
        out_shape=jax.ShapeDtypeStruct((B, T, H), jnp.float32),
        in_specs=[_VMEM()] * 6,
        out_specs=_VMEM(),
    )(position, hist_embeds, p["w"], p["b"], p["gamma"], p["beta"])


# ----------------------------------------------------------------------------------
# Kernel 3: mode == 'visual' heads — single fused launch computing
#   hist_mapped = history_mapper(hist_embeds)
#   pos_logit   = target_predictor(pos_embeds * txt_embeds[:, :1]).squeeze(-1)
#   states      = txt_embeds[:, 0] * hist_embeds[:, 0]
# ----------------------------------------------------------------------------------
def _visual_kernel(hist_ref, pos_ref, txt_ref,
                   w1h_ref, b1h_ref, w2h_ref, b2h_ref,
                   w1t_ref, b1t_ref, w2t_ref, b2t_ref,
                   hist_out_ref, logit_out_ref, states_out_ref):
    f32 = jnp.float32
    hist = hist_ref[...].astype(f32)          # (B, T, H)
    pos = pos_ref[...].astype(f32)            # (B, P, H)
    txt = txt_ref[...].astype(f32)            # (B, L, H)
    B = hist.shape[0]

    # ---- history_mapper: Linear -> ReLU -> Linear (weights shared across batch) ----
    w1h = jnp.broadcast_to(w1h_ref[...], (B,) + w1h_ref.shape)    # (B, H, H)
    w2h = jnp.broadcast_to(w2h_ref[...], (B,) + w2h_ref.shape)
    hh = jnp.einsum('bth,bhk->btk', hist, w1h,
                    preferred_element_type=f32) + b1h_ref[...]
    hh = jnp.maximum(hh, 0.0)
    hm = jnp.einsum('bth,bhk->btk', hh, w2h,
                    preferred_element_type=f32) + b2h_ref[...]
    hist_out_ref[...] = hm.astype(hist_out_ref.dtype)

    # ---- target_predictor on pos_embeds * txt[:, :1] ----
    xt = pos * txt[:, 0:1, :]                                     # (B, P, H) VPU bcast-mul
    w1t = jnp.broadcast_to(w1t_ref[...], (B,) + w1t_ref.shape)    # (B, H, Hh)
    ht = jnp.einsum('bph,bhk->bpk', xt, w1t,
                    preferred_element_type=f32) + b1t_ref[...]
    ht = jnp.maximum(ht, 0.0)                                     # (B, P, Hh)
    # final (Hh -> 1) projection: elementwise * weight row + lane reduce (XLU),
    # producing a lane-dense (B, P) output instead of a 1-column MXU matmul.
    logit = jnp.sum(ht * w2t_ref[...], axis=-1) + b2t_ref[0]      # (B, P)
    logit_out_ref[...] = logit.astype(logit_out_ref.dtype)

    # ---- states = txt_embeds[:, 0] * hist_embeds[:, 0] ----
    states = txt[:, 0:1, :] * hist[:, 0:1, :]                     # (B, 1, H)
    states_out_ref[...] = states.astype(states_out_ref.dtype)


def visual_forward(txt_embeds, hist_embeds, pos_embeds, params):
    """Returns (pos_logit (B,P), hist_mapped (B,T,H), states (B,H)) in one launch."""
    B, T, H = hist_embeds.shape
    P = pos_embeds.shape[1]
    hm, tp = params["history_mapper"], params["target_predictor"]
    hist_mapped, pos_logit, states3 = pl.pallas_call(
        _visual_kernel,
        out_shape=(jax.ShapeDtypeStruct((B, T, H), jnp.float32),
                   jax.ShapeDtypeStruct((B, P), jnp.float32),
                   jax.ShapeDtypeStruct((B, 1, H), jnp.float32)),
        in_specs=[_VMEM()] * 10 + [_SMEM()],     # tiny final bias scalar in SMEM
        out_specs=(_VMEM(), _VMEM(), _VMEM()),
    )(hist_embeds, pos_embeds, txt_embeds,
      hm["w1"], hm["b1"], hm["w2"], hm["b2"],
      tp["w1"], tp["b1"], tp["w2"], tp["b2"])
    return pos_logit, hist_mapped, states3[:, 0]


# ----------------------------------------------------------------------------------
# Parameter construction (deterministic, synthetic — no checkpoint load)
# Linear weights stored (in, out) so kernels do x @ W + b  == PyTorch x @ weight.T + b,
# except target_predictor.w2 which keeps PyTorch's (1, Hh) layout (used as a row).
# ----------------------------------------------------------------------------------
def make_params(key, hidden=HIDDEN):
    ks = jax.random.split(key, 8)
    s = 0.05
    hh = hidden // 2
    return {
        "position_encoder": {
            "w": s * jax.random.normal(ks[0], (3, hidden), jnp.float32),
            "b": s * jax.random.normal(ks[1], (1, hidden), jnp.float32),
            "gamma": jnp.ones((1, hidden), jnp.float32),
            "beta": jnp.zeros((1, hidden), jnp.float32),
        },
        "history_mapper": {
            "w1": s * jax.random.normal(ks[2], (hidden, hidden), jnp.float32),
            "b1": s * jax.random.normal(ks[3], (1, hidden), jnp.float32),
            "w2": s * jax.random.normal(ks[4], (hidden, hidden), jnp.float32),
            "b2": jnp.zeros((1, hidden), jnp.float32),
        },
        "target_predictor": {
            "w1": s * jax.random.normal(ks[5], (hidden, hh), jnp.float32),
            "b1": s * jax.random.normal(ks[6], (1, hh), jnp.float32),
            "w2": s * jax.random.normal(ks[7], (1, hh), jnp.float32),  # Linear(hh,1).weight
            "b2": jnp.zeros((1,), jnp.float32),                        # Linear(hh,1).bias
        },
    }


# ----------------------------------------------------------------------------------
# Module-level forward (the parts computed by VLNBertCMT itself)
# ----------------------------------------------------------------------------------
def vlnbert_cmt_forward(mode, params, *, global_pos=None, txt_embeds=None,
                        pos_embeds=None, hist_embeds=None, position=None,
                        return_states=False):
    if mode == "global_pos":
        if isinstance(txt_embeds, (list, tuple)):
            txt_embeds = txt_embeds[0]
        return global_pos_forward(global_pos, txt_embeds, params)

    elif mode == "history":
        # TODO(synk): hist_embeds = self.vln_bert('history', ...) — external BERT
        # backbone (get_vlnbert_models) is not defined in this file; drop_env is a
        # no-op at inference.
        return history_forward(hist_embeds, position, params)

    elif mode == "visual":
        # TODO(synk): act_logits / txt_embeds / hist_embeds / ob_embeds / pos_embeds come
        # from self.vln_bert('visual', ...) (external backbone); here the module-owned
        # heads (history_mapper, target_predictor, states fusion) run on synthetic
        # backbone outputs, all in one fused kernel.
        pos_logit, hist_mapped, states = visual_forward(
            txt_embeds, hist_embeds, pos_embeds, params)
        if return_states:
            return pos_logit, hist_mapped, states
        return pos_logit, hist_mapped

    raise ValueError(mode)


# ----------------------------------------------------------------------------------
# Pure-JAX reference for correctness checking
# ----------------------------------------------------------------------------------
def _ref_position_encoder(x, p):
    h = x @ p["w"] + p["b"]
    mu = h.mean(-1, keepdims=True)
    var = ((h - mu) ** 2).mean(-1, keepdims=True)
    return (h - mu) / jnp.sqrt(var + EPS) * p["gamma"] + p["beta"]


def _ref_global_pos(gp, txt, p):
    return _ref_position_encoder(gp, p["position_encoder"]) * txt[:, :1, :]


def _ref_history(hist, pos, p):
    return hist + _ref_position_encoder(pos, p["position_encoder"])


def _ref_visual(txt, hist, pe, p):
    hm, tp = p["history_mapper"], p["target_predictor"]
    hist_mapped = jnp.maximum(hist @ hm["w1"] + hm["b1"], 0.0) @ hm["w2"] + hm["b2"]
    x = pe * txt[:, :1, :]
    h = jnp.maximum(x @ tp["w1"] + tp["b1"], 0.0)
    pos_logit = (h @ tp["w2"].T + tp["b2"])[..., 0]
    states = txt[:, 0] * hist[:, 0]
    return pos_logit, hist_mapped, states


# ----------------------------------------------------------------------------------
if __name__ == "__main__":
    key = jax.random.PRNGKey(0)
    kp, k1, k2, k3, k4, k5 = jax.random.split(key, 6)

    B, H = 2, HIDDEN
    N_POS, P, T, L = 8, 8, 6, 5

    params = make_params(kp, H)

    global_pos = jax.random.normal(k1, (B, N_POS, 3), jnp.float32)
    txt_embeds = jax.random.normal(k2, (B, L, H), jnp.float32)
    pos_embeds = jax.random.normal(k3, (B, P, H), jnp.float32)
    hist_embeds = jax.random.normal(k4, (B, T, H), jnp.float32)
    position = jax.random.normal(k5, (B, T, 3), jnp.float32)

    # --- mode == 'global_pos' -----------------------------------------------------
    gp_out = vlnbert_cmt_forward("global_pos", params,
                                 global_pos=global_pos, txt_embeds=txt_embeds)

    # --- mode == 'history' tail ---------------------------------------------------
    hist_out = vlnbert_cmt_forward("history", params,
                                   hist_embeds=hist_embeds, position=position)

    # --- mode == 'visual' heads (single fused kernel) ------------------------------
    pos_logit, hist_mapped, states = vlnbert_cmt_forward(
        "visual", params, txt_embeds=txt_embeds, pos_embeds=pos_embeds,
        hist_embeds=hist_embeds, return_states=True)

    (gp_out, hist_out, pos_logit, hist_mapped, states) = jax.block_until_ready(
        (gp_out, hist_out, pos_logit, hist_mapped, states))

    # --- correctness vs pure-JAX reference ------------------------------------------
    np.testing.assert_allclose(
        np.asarray(gp_out),
        np.asarray(_ref_global_pos(global_pos, txt_embeds, params)),
        rtol=1e-5, atol=1e-5)
    np.testing.assert_allclose(
        np.asarray(hist_out),
        np.asarray(_ref_history(hist_embeds, position, params)),
        rtol=1e-5, atol=1e-5)
    ref_logit, ref_hist_mapped, ref_states = _ref_visual(
        txt_embeds, hist_embeds, pos_embeds, params)
    np.testing.assert_allclose(np.asarray(pos_logit), np.asarray(ref_logit),
                               rtol=1e-5, atol=1e-5)
    np.testing.assert_allclose(np.asarray(hist_mapped), np.asarray(ref_hist_mapped),
                               rtol=1e-5, atol=1e-5)
    np.testing.assert_allclose(np.asarray(states), np.asarray(ref_states),
                               rtol=1e-5, atol=1e-5)

    print("KERNEL_OK")
</pallas_src>

<mosaic_0001>
module attributes {stable_mosaic.version = 11 : i64} {
  func.func @_global_pos_kernel(%arg0: memref<2x8x3xf32, #tpu.memory_space<vmem>>, %arg1: memref<2x5x32xf32, #tpu.memory_space<vmem>>, %arg2: memref<3x32xf32, #tpu.memory_space<vmem>>, %arg3: memref<1x32xf32, #tpu.memory_space<vmem>>, %arg4: memref<1x32xf32, #tpu.memory_space<vmem>>, %arg5: memref<1x32xf32, #tpu.memory_space<vmem>>, %arg6: memref<2x8x32xf32, #tpu.memory_space<vmem>>) attributes {dimension_semantics = [], scalar_prefetch = 0 : i64, scratch_operands = 0 : i64, tpu.core_type = #tpu.core_type<tc>} {
    %c0 = arith.constant 0 : index
    %c0_0 = arith.constant 0 : index
    %c0_1 = arith.constant 0 : index
    %0 = vector.load %arg0[%c0, %c0_0, %c0_1] : memref<2x8x3xf32, #tpu.memory_space<vmem>>, vector<2x8x3xf32>
    %c0_2 = arith.constant 0 : index
    %c0_3 = arith.constant 0 : index
    %1 = vector.load %arg2[%c0_2, %c0_3] : memref<3x32xf32, #tpu.memory_space<vmem>>, vector<3x32xf32>
    %c0_4 = arith.constant 0 : index
    %c0_5 = arith.constant 0 : index
    %2 = vector.load %arg3[%c0_4, %c0_5] : memref<1x32xf32, #tpu.memory_space<vmem>>, vector<1x32xf32>
    %c0_6 = arith.constant 0 : index
    %c0_7 = arith.constant 0 : index
    %3 = vector.load %arg4[%c0_6, %c0_7] : memref<1x32xf32, #tpu.memory_space<vmem>>, vector<1x32xf32>
    %c0_8 = arith.constant 0 : index
    %c0_9 = arith.constant 0 : index
    %4 = vector.load %arg5[%c0_8, %c0_9] : memref<1x32xf32, #tpu.memory_space<vmem>>, vector<1x32xf32>
    %5 = vector.extract_strided_slice %0 {offsets = [0, 0, 0], sizes = [2, 8, 1], strides = [1, 1, 1]} : vector<2x8x3xf32> to vector<2x8x1xf32>
    %6 = vector.extract_strided_slice %1 {offsets = [0, 0], sizes = [1, 32], strides = [1, 1]} : vector<3x32xf32> to vector<1x32xf32>
    %7 = vector.shape_cast %6 : vector<1x32xf32> to vector<1x1x32xf32>
    %8 = vector.broadcast %5 : vector<2x8x1xf32> to vector<2x8x32xf32>
    %9 = vector.broadcast %7 : vector<1x1x32xf32> to vector<2x8x32xf32>
    %10 = arith.mulf %8, %9 : vector<2x8x32xf32>
    %11 = vector.extract_strided_slice %0 {offsets = [0, 0, 1], sizes = [2, 8, 1], strides = [1, 1, 1]} : vector<2x8x3xf32> to vector<2x8x1xf32>
    %12 = vector.extract_strided_slice %1 {offsets = [1, 0], sizes = [1, 32], strides = [1, 1]} : vector<3x32xf32> to vector<1x32xf32>
    %13 = vector.shape_cast %12 : vector<1x32xf32> to vector<1x1x32xf32>
    %14 = vector.broadcast %11 : vector<2x8x1xf32> to vector<2x8x32xf32>
    %15 = vector.broadcast %13 : vector<1x1x32xf32> to vector<2x8x32xf32>
    %16 = arith.mulf %14, %15 : vector<2x8x32xf32>
    %17 = arith.addf %10, %16 : vector<2x8x32xf32>
    %18 = vector.extract_strided_slice %0 {offsets = [0, 0, 2], sizes = [2, 8, 1], strides = [1, 1, 1]} : vector<2x8x3xf32> to vector<2x8x1xf32>
    %19 = vector.extract_strided_slice %1 {offsets = [2, 0], sizes = [1, 32], strides = [1, 1]} : vector<3x32xf32> to vector<1x32xf32>
    %20 = vector.shape_cast %19 : vector<1x32xf32> to vector<1x1x32xf32>
    %21 = vector.broadcast %18 : vector<2x8x1xf32> to vector<2x8x32xf32>
    %22 = vector.broadcast %20 : vector<1x1x32xf32> to vector<2x8x32xf32>
    %23 = arith.mulf %21, %22 : vector<2x8x32xf32>
    %24 = arith.addf %17, %23 : vector<2x8x32xf32>
    %25 = vector.shape_cast %2 : vector<1x32xf32> to vector<1x1x32xf32>
    %26 = vector.broadcast %25 : vector<1x1x32xf32> to vector<2x8x32xf32>
    %27 = arith.addf %24, %26 : vector<2x8x32xf32>
    %cst = arith.constant dense<0.000000e+00> : vector<2x8xf32>
    %28 = vector.multi_reduction <add>, %27, %cst [2] : vector<2x8x32xf32> to vector<2x8xf32>
    %29 = vector.shape_cast %28 : vector<2x8xf32> to vector<2x8x1xf32>
    %cst_10 = arith.constant 3.200000e+01 : f32
    %30 = vector.broadcast %cst_10 : f32 to vector<2x8x1xf32>
    %31 = arith.divf %29, %30 : vector<2x8x1xf32>
    %32 = vector.broadcast %31 : vector<2x8x1xf32> to vector<2x8x32xf32>
    %33 = arith.subf %27, %32 : vector<2x8x32xf32>
    %34 = arith.mulf %33, %33 : vector<2x8x32xf32>
    %cst_11 = arith.constant dense<0.000000e+00> : vector<2x8xf32>
    %35 = vector.multi_reduction <add>, %34, %cst_11 [2] : vector<2x8x32xf32> to vector<2x8xf32>
    %36 = vector.shape_cast %35 : vector<2x8xf32> to vector<2x8x1xf32>
    %cst_12 = arith.constant 3.200000e+01 : f32
    %37 = vector.broadcast %cst_12 : f32 to vector<2x8x1xf32>
    %38 = arith.divf %36, %37 : vector<2x8x1xf32>
    %39 = vector.broadcast %31 : vector<2x8x1xf32> to vector<2x8x32xf32>
    %40 = arith.subf %27, %39 : vector<2x8x32xf32>
    %cst_13 = arith.constant 9.99999996E-13 : f32
    %41 = vector.broadcast %cst_13 : f32 to vector<2x8x1xf32>
    %42 = arith.addf %38, %41 : vector<2x8x1xf32>
    %43 = math.rsqrt %42 : vector<2x8x1xf32>
    %44 = vector.broadcast %43 : vector<2x8x1xf32> to vector<2x8x32xf32>
    %45 = arith.mulf %40, %44 : vector<2x8x32xf32>
    %46 = vector.shape_cast %3 : vector<1x32xf32> to vector<1x1x32xf32>
    %47 = vector.broadcast %46 : vector<1x1x32xf32> to vector<2x8x32xf32>
    %48 = arith.mulf %45, %47 : vector<2x8x32xf32>
    %49 = vector.shape_cast %4 : vector<1x32xf32> to vector<1x1x32xf32>
    %50 = vector.broadcast %49 : vector<1x1x32xf32> to vector<2x8x32xf32>
    %51 = arith.addf %48, %50 : vector<2x8x32xf32>
    %c0_14 = arith.constant 0 : index
    %c0_15 = arith.constant 0 : index
    %c0_16 = arith.constant 0 : index
    %52 = vector.load %arg1[%c0_14, %c0_15, %c0_16] : memref<2x5x32xf32, #tpu.memory_space<vmem>>, vector<2x5x32xf32>
    %53 = vector.extract_strided_slice %52 {offsets = [0, 0, 0], sizes = [2, 1, 32], strides = [1, 1, 1]} : vector<2x5x32xf32> to vector<2x1x32xf32>
    %54 = vector.broadcast %53 : vector<2x1x32xf32> to vector<2x8x32xf32>
    %55 = arith.mulf %51, %54 : vector<2x8x32xf32>
    %c0_17 = arith.constant 0 : index
    %c0_18 = arith.constant 0 : index
    %c0_19 = arith.constant 0 : index
    %56 = vector.load %arg6[%c0_17, %c0_18, %c0_19] : memref<2x8x32xf32, #tpu.memory_space<vmem>>, vector<2x8x32xf32>
    tpu.vector_store %arg6[%c0_17, %c0_18, %c0_19], %55 {strides = array<i32>} : memref<2x8x32xf32, #tpu.memory_space<vmem>>, vector<2x8x32xf32>,
    return
  }
}

</mosaic_0001>

<llo_original>
// kernel: tpu_custom_call.1
$region0: #{tpu_custom_call.1}
  #allocation0 [shape = 'u32[]', space=smem, size = 0x4, offset = 0x4, fixed_abs, tag = 'smem constant byte address 0x4 - core index']
  #allocation1 [shape = 'u32[144,128]{1,0:T(1,128)}', space=vmem, size = 0x12000, scoped, tag = 'internal scratch']
  %s0 = inlined_call_operand.vmem [shape: f32[2,8,3], index: 0, kind: input, shape index: {}]
  %s1 = inlined_call_operand.vmem [shape: f32[2,5,32], index: 1, kind: input, shape index: {}]
  %s2 = inlined_call_operand.vmem [shape: f32[3,32], index: 2, kind: input, shape index: {}]
  %s3 = inlined_call_operand.vmem [shape: f32[1,32], index: 3, kind: input, shape index: {}]
  %s4 = inlined_call_operand.vmem [shape: f32[1,32], index: 4, kind: input, shape index: {}]
  %s5 = inlined_call_operand.vmem [shape: f32[1,32], index: 5, kind: input, shape index: {}]
  %s6 = inlined_call_operand.hbm [shape: f32[2,8,32], index: 6, kind: output, shape index: {}]
  %s7 = sld [smem:[#allocation0]]
  $region34: #{tpu_custom_call.1} parent=0
    _
  %s9 = ssub.s32 1, %s7
  %s10 = scalar_select 0, %s9, %s7
  $region1: #{tpu_custom_call.1} parent=0
    #allocation2 [shape = 'u8[8192]{0}', space=vmem, size = 0x2000, scoped, tag = 'output window, operand 0, single buffered']
    #allocation3 [shape = 's32[1]{0}', space=sflag, size = 0x4, scoped, tag = 'scoped memory for tpu_custom_call.1']
    %11 = vsyncpa [#allocation3], 0
    // Predicated region
    $region2: #{tpu_custom_call.1} parent=1 // pred_check
      _
    $region3: #{tpu_custom_call.1} parent=1 // pred_check_branch
      %13 = sbr.rel (0) target = $region5
    $region4: #{tpu_custom_call.1} parent=1 // pred_region
      _
    $region5: #{tpu_custom_call.1} parent=1 // pred_fallthru
      _
    // Predicated region
    $region6: #{tpu_custom_call.1} parent=1 // pred_check
      _
    $region7: #{tpu_custom_call.1} parent=1 // pred_check_branch
      %15 = sbr.rel (0) target = $region9
    $region8: #{tpu_custom_call.1} parent=1 // pred_region
      _
    $region9: #{tpu_custom_call.1} parent=1 // pred_fallthru
      _
    // Predicated region
    $region10: #{tpu_custom_call.1} parent=1 // pred_check
      _
    $region11: #{tpu_custom_call.1} parent=1 // pred_check_branch
      %17 = sbr.rel (0) target = $region13
    $region12: #{tpu_custom_call.1} parent=1 // pred_region
      _
    $region13: #{tpu_custom_call.1} parent=1 // pred_fallthru
      _
    // Predicated region
    $region14: #{tpu_custom_call.1} parent=1 // pred_check
      _
    $region15: #{tpu_custom_call.1} parent=1 // pred_check_branch
      %19 = sbr.rel (0) target = $region17
    $region16: #{tpu_custom_call.1} parent=1 // pred_region
      _
    $region17: #{tpu_custom_call.1} parent=1 // pred_fallthru
      _
    // Predicated region
    $region18: #{tpu_custom_call.1} parent=1 // pred_check
      _
    $region19: #{tpu_custom_call.1} parent=1 // pred_check_branch
      %21 = sbr.rel (0) target = $region21
    $region20: #{tpu_custom_call.1} parent=1 // pred_region
      _
    $region21: #{tpu_custom_call.1} parent=1 // pred_fallthru
      _
    // Predicated region
    $region22: #{tpu_custom_call.1} parent=1 // pred_check
      _
    $region23: #{tpu_custom_call.1} parent=1 // pred_check_branch
      %23 = sbr.rel (0) target = $region25
    $region24: #{tpu_custom_call.1} parent=1 // pred_region
      _
    $region25: #{tpu_custom_call.1} parent=1 // pred_fallthru
      _
    %v24 = vld [vmem:[%s0] sm:$0xff]
    %v25 = vld [vmem:[%s0 + $0x8] sm:$0xff]
    %v26 = vld [vmem:[%s2] sm:$0x7]
    %v27 = vld [vmem:[%s3] sm:$0x1]
    %v28 = vld [vmem:[%s4] sm:$0x1]
    %v29 = vld [vmem:[%s5] sm:$0x1]
    %31 = vset.pattern.permute.xlu0 0
    %32 = vperm.xlu0 %31, %v24
    %v33 = vpop.permute.xlu0 %32
    %36 = vset.pattern.permute.xlu0 0
    %37 = vperm.xlu0 %36, %v25
    %v38 = vpop.permute.xlu0 %37
    %v40 = vlaneseq
    %v41 = vshrl.u32 %v40, 7
    %v42 = vsub.s32 0, %v41
    %v43 = vrot.slane %v26, %v42
    %v44 = vmul.f32 %v33, %v43
    %v45 = vmul.f32 %v38, %v43
    %46 = vset.pattern.permute.xlu0 1
    %47 = vperm.xlu0 %46, %v24
    %v48 = vpop.permute.xlu0 %47
    %50 = vset.pattern.permute.xlu0 1
    %51 = vperm.xlu0 %50, %v25
    %v52 = vpop.permute.xlu0 %51
    %v54 = vlaneseq
    %v55 = vshrl.u32 %v54, 7
    %v56 = vsub.s32 1, %v55
    %v57 = vrot.slane %v26, %v56
    %v58 = vmul.f32 %v48, %v57
    %v59 = vmul.f32 %v52, %v57
    %v60 = vadd.f32 %v44, %v58
    %v61 = vadd.f32 %v45, %v59
    %62 = vset.pattern.permute.xlu0 2
    %63 = vperm.xlu0 %62, %v24
    %v64 = vpop.permute.xlu0 %63
    %66 = vset.pattern.permute.xlu0 2
    %67 = vperm.xlu0 %66, %v25
    %v68 = vpop.permute.xlu0 %67
    %v70 = vlaneseq
    %v71 = vshrl.u32 %v70, 7
    %v72 = vsub.s32 2, %v71
    %v73 = vrot.slane %v26, %v72
    %v74 = vmul.f32 %v64, %v73
    %v75 = vmul.f32 %v68, %v73
    %v76 = vadd.f32 %v60, %v74
    %v77 = vadd.f32 %v61, %v75
    %v79 = vlaneseq
    %v80 = vshrl.u32 %v79, 7
    %v81 = vsub.s32 0, %v80
    %v82 = vrot.slane %v27, %v81
    %v84 = vadd.f32 %v76, %v82
    %v85 = vadd.f32 %v77, %v82
    %vm86 = vcmask 261120
    %v87 = vsel %vm86, %v84, 0.0
    %88 = vadd.xlane.f32.xlu0 %v87
    %v89 = vpop.xlane.xlu0 %88
    %v90 = vsel %vm86, %v85, 0.0
    %91 = vadd.xlane.f32.xlu0 %v90
    %v92 = vpop.xlane.xlu0 %91
    %v93 = vrcp.pop 32.0
    %v94 = vmul.f32 %v89, %v93
    %v95 = vmul.f32 %v92, %v93
    %v96 = vsub.f32 %v84, %v94
    %v97 = vsub.f32 %v85, %v95
    %v98 = vmul.f32 %v96, %v96
    %v99 = vmul.f32 %v97, %v97
    %v100 = vsel %vm86, %v98, 0.0
    %101 = vadd.xlane.f32.xlu0 %v100
    %v102 = vpop.xlane.xlu0 %101
    %v103 = vsel %vm86, %v99, 0.0
    %104 = vadd.xlane.f32.xlu0 %v103
    %v105 = vpop.xlane.xlu0 %104
    %v106 = vmul.f32 %v102, %v93
    %v107 = vmul.f32 %v105, %v93
    %v108 = vadd.f32 %v106, 1e-12
    %v109 = vadd.f32 %v107, 1e-12
    %v110 = vrsqrt.pop %v108
    %v111 = vrsqrt.pop %v109
    %v112 = vmul.f32 %v96, %v110
    %v113 = vmul.f32 %v97, %v111
    %v115 = vlaneseq
    %v116 = vshrl.u32 %v115, 7
    %v117 = vsub.s32 0, %v116
    %v118 = vrot.slane %v28, %v117
    %v120 = vmul.f32 %v112, %v118
    %v121 = vmul.f32 %v113, %v118
    %v123 = vlaneseq
    %v124 = vshrl.u32 %v123, 7
    %v125 = vsub.s32 0, %v124
    %v126 = vrot.slane %v29, %v125
    %v128 = vadd.f32 %v120, %v126
    %v129 = vadd.f32 %v121, %v126
    %v130 = vld [vmem:[%s1] sm:$0x1f]
    %v131 = vld [vmem:[%s1 + $0x8] sm:$0x1f]
    %v132 = vlaneseq
    %v133 = vshrl.u32 %v132, 7
    %v134 = vsub.s32 0, %v133
    %v135 = vrot.slane %v130, %v134
    %v136 = vlaneseq
    %v137 = vshrl.u32 %v136, 7
    %v138 = vsub.s32 0, %v137
    %v139 = vrot.slane %v131, %v138
    %v140 = vmul.f32 %v128, %v135
    %v141 = vmul.f32 %v129, %v139
    %142 = vst.msk [vmem:[#allocation2] sm:$0xff] %vm86, %v140
    %143 = vst.msk [vmem:[#allocation2 + $0x8] sm:$0xff] %vm86, %v141
    // Predicated region
    $region26: #{tpu_custom_call.1} parent=1 // pred_check
      _
    $region27: #{tpu_custom_call.1} parent=1 // pred_check_branch
      %145 = sbr.rel (0) target = $region29
    $region28: #{tpu_custom_call.1} parent=1 // pred_region
      %s147 = ssub.s32 256, 256
      %148 = vsyncadd [#allocation3], %s147
      %s149 = sshll.u32 [#allocation2], 4
      %s150 = int_to_ptr.vmem [resolvable:$true] %s149
      %155 = dma.vmem_to_hbm [thread:$0]  %s150, 256, %s6, [#allocation3], 128, 128, 8
    $region29: #{tpu_custom_call.1} parent=1 // pred_fallthru
      _
    // Predicated region
    $region30: #{tpu_custom_call.1} parent=1 // pred_check
      _
    $region31: #{tpu_custom_call.1} parent=1 // pred_check_branch
      %157 = sbr.rel (0) target = $region33
    $region32: #{tpu_custom_call.1} parent=1 // pred_region
      %158 = dma.done [#allocation3], 256
    $region33: #{tpu_custom_call.1} parent=1 // pred_fallthru
      _
    %159 = vsyncpa [#allocation3], 1

</llo_original>
